<compile_context>
chip_gen: v6e
topology: v6e:2x2x1
jax: 0.10.0
libtpu: 0.0.40
codegen_flags: <defaults>
</compile_context>

<pallas_src>
import jax
import jax.numpy as jnp
from jax.experimental import pallas as pl
from jax.experimental.pallas import tpu as pltpu


def _unimodal_kernel(xt_ref, xi_ref,
                     tw1_ref, tsc1_ref, tsh1_ref, tw2_ref, tsc2_ref, tsh2_ref,
                     iw1_ref, isc1_ref, ish1_ref, iw2_ref, isc2_ref, ish2_ref,
                     out_t_ref, out_i_ref):
    """Both branches of UnimodalDetection fused in one (grid-less) invocation."""

    def branch(x, w1, sc1, sh1, w2, sc2, sh2, out_ref):
        # Layer 1: bf16 matmul -> f32 acc, BN scale/shift in f32, ReLU.
        h = jnp.dot(x, w1, preferred_element_type=jnp.float32)
        h = jnp.maximum(h * sc1 + sh1, 0.0)
        # Dropout: identity (eval mode).
        # Layer 2: same pattern; re-cast activations to bf16 for the MXU.
        z = jnp.dot(h.astype(w2.dtype), w2, preferred_element_type=jnp.float32)
        out_ref[...] = jnp.maximum(z * sc2 + sh2, 0.0)

    branch(xt_ref[...], tw1_ref[...], tsc1_ref[...], tsh1_ref[...],
           tw2_ref[...], tsc2_ref[...], tsh2_ref[...], out_t_ref)
    branch(xi_ref[...], iw1_ref[...], isc1_ref[...], ish1_ref[...],
           iw2_ref[...], isc2_ref[...], ish2_ref[...], out_i_ref)


def _bn_scale_shift(b, gamma, beta, mean, var, eps):
    """Fold Linear bias + eval-mode BatchNorm1d into per-feature (scale, shift).

    y = ((x @ w + b) - mean) / sqrt(var+eps) * gamma + beta
      = (x @ w) * scale + shift,  scale = gamma/sqrt(var+eps),
                                  shift = beta + (b - mean) * scale
    """
    scale = gamma / jnp.sqrt(var + eps)
    shift = beta + (b - mean) * scale
    return scale, shift


def prepare_branch_params(params, eps=1e-5, compute_dtype=jnp.bfloat16):
    """ONE-TIME prep (call outside the hot path): bf16 weights + f32 scale/shift.

    Weights are kept unscaled so bf16 quantization is not compounded by the BN
    scale; scale/shift are applied in the f32 epilogue inside the kernel.
    """
    (w1, b1, g1, be1, m1, v1, w2, b2, g2, be2, m2, v2) = params
    sc1, sh1 = _bn_scale_shift(b1, g1, be1, m1, v1, eps)
    sc2, sh2 = _bn_scale_shift(b2, g2, be2, m2, v2, eps)
    return (w1.astype(compute_dtype),
            sc1[None, :].astype(jnp.float32), sh1[None, :].astype(jnp.float32),
            w2.astype(compute_dtype),
            sc2[None, :].astype(jnp.float32), sh2[None, :].astype(jnp.float32))


def _unimodal_call(text_encoding, image_encoding, text_prep, image_prep):
    B = text_encoding.shape[0]
    assert image_encoding.shape[0] == B
    tw1, _, _, tw2, _, _ = text_prep
    iw1, _, _, iw2, _, _ = image_prep
    shared = tw1.shape[1]
    prime = tw2.shape[1]

    xt = text_encoding.astype(tw1.dtype)
    xi = image_encoding.astype(iw1.dtype)

    flops = (2 * B * (tw1.shape[0] * shared + shared * prime)
             + 2 * B * (iw1.shape[0] * shared + shared * prime))
    bytes_accessed = ((xt.size + xi.size + tw1.size + tw2.size
                       + iw1.size + iw2.size) * 2            # bf16 operands
                      + 4 * (shared + prime) * 4             # f32 scale/shift
                      + 2 * B * prime * 4)                   # f32 outputs

    vmem = pl.BlockSpec(memory_space=pltpu.MemorySpace.VMEM)  # full-array blocks
    out_t, out_i = pl.pallas_call(
        _unimodal_kernel,
        out_shape=(jax.ShapeDtypeStruct((B, prime), jnp.float32),
                   jax.ShapeDtypeStruct((B, prime), jnp.float32)),
        in_specs=[vmem] * 14,
        out_specs=(vmem, vmem),
        cost_estimate=pl.CostEstimate(flops=flops, transcendentals=0,
                                      bytes_accessed=bytes_accessed),
    )(xt, xi, *text_prep, *image_prep)
    return out_t, out_i


# Hot-path entry point: prepared (folded/cast) params are passed in as-is.
unimodal_detection = jax.jit(_unimodal_call)


def init_branch_params(key, in_dim, shared_dim, prime_dim):
    """Deterministic synthetic parameters (shapes as in the PyTorch module)."""
    ks = jax.random.split(key, 8)
    # Linear weights stored transposed: (in, out) so the kernel does x @ W.
    w1 = jax.random.normal(ks[0], (in_dim, shared_dim), jnp.float32) * 0.05
    b1 = jax.random.normal(ks[1], (shared_dim,), jnp.float32) * 0.05
    g1 = 1.0 + 0.1 * jax.random.normal(ks[2], (shared_dim,), jnp.float32)
    be1 = 0.1 * jax.random.normal(ks[3], (shared_dim,), jnp.float32)
    m1 = jnp.zeros((shared_dim,), jnp.float32)
    v1 = jnp.ones((shared_dim,), jnp.float32)

    w2 = jax.random.normal(ks[4], (shared_dim, prime_dim), jnp.float32) * 0.05
    b2 = jax.random.normal(ks[5], (prime_dim,), jnp.float32) * 0.05
    g2 = 1.0 + 0.1 * jax.random.normal(ks[6], (prime_dim,), jnp.float32)
    be2 = 0.1 * jax.random.normal(ks[7], (prime_dim,), jnp.float32)
    m2 = jnp.zeros((prime_dim,), jnp.float32)
    v2 = jnp.ones((prime_dim,), jnp.float32)
    return (w1, b1, g1, be1, m1, v1, w2, b2, g2, be2, m2, v2)


if __name__ == "__main__":
    # Module-consistent small shapes: batch=8, text dim=32, image dim=64,
    # shared_dim=256, prime_dim=512 (module defaults).
    B = 8
    D_TEXT = 32
    D_IMG = 64
    SHARED = 256
    PRIME = 512

    key = jax.random.PRNGKey(0)
    k_txt_in, k_img_in, k_txt_p, k_img_p = jax.random.split(key, 4)

    text_encoding = jax.random.normal(k_txt_in, (B, D_TEXT), jnp.float32)
    image_encoding = jax.random.normal(k_img_in, (B, D_IMG), jnp.float32)

    text_params = init_branch_params(k_txt_p, D_TEXT, SHARED, PRIME)
    image_params = init_branch_params(k_img_p, D_IMG, SHARED, PRIME)

    # One-time weight preparation (hoisted out of the per-call path).
    text_prep = jax.tree_util.tree_map(jnp.asarray,
                                       prepare_branch_params(text_params))
    image_prep = jax.tree_util.tree_map(jnp.asarray,
                                        prepare_branch_params(image_params))

    text_prime, image_prime = unimodal_detection(
        text_encoding, image_encoding, text_prep, image_prep)
    jax.block_until_ready((text_prime, image_prime))

    assert text_prime.shape == (B, PRIME)
    assert image_prime.shape == (B, PRIME)

    # Pure-JAX f32 reference (eval-mode BN, identity dropout). Kernel runs the
    # matmuls in bf16, so the comparison tolerance is loosened accordingly.
    def ref_branch(x, params):
        (w1, b1, g1, be1, m1, v1, w2, b2, g2, be2, m2, v2) = params
        h = x @ w1 + b1
        h = (h - m1) / jnp.sqrt(v1 + 1e-5) * g1 + be1
        h = jnp.maximum(h, 0.0)
        z = h @ w2 + b2
        z = (z - m2) / jnp.sqrt(v2 + 1e-5) * g2 + be2
        return jnp.maximum(z, 0.0)

    ref_t = ref_branch(text_encoding, text_params)
    ref_i = ref_branch(image_encoding, image_params)
    assert jnp.allclose(text_prime, ref_t, atol=2e-2, rtol=2e-2)
    assert jnp.allclose(image_prime, ref_i, atol=2e-2, rtol=2e-2)

    print("KERNEL_OK")
</pallas_src>

<mosaic_0001>
module attributes {stable_mosaic.version = 11 : i64} {
  func.func @_unimodal_kernel(%arg0: memref<8x32xbf16, #tpu.memory_space<vmem>>, %arg1: memref<8x64xbf16, #tpu.memory_space<vmem>>, %arg2: memref<32x256xbf16, #tpu.memory_space<vmem>>, %arg3: memref<1x256xf32, #tpu.memory_space<vmem>>, %arg4: memref<1x256xf32, #tpu.memory_space<vmem>>, %arg5: memref<256x512xbf16, #tpu.memory_space<vmem>>, %arg6: memref<1x512xf32, #tpu.memory_space<vmem>>, %arg7: memref<1x512xf32, #tpu.memory_space<vmem>>, %arg8: memref<64x256xbf16, #tpu.memory_space<vmem>>, %arg9: memref<1x256xf32, #tpu.memory_space<vmem>>, %arg10: memref<1x256xf32, #tpu.memory_space<vmem>>, %arg11: memref<256x512xbf16, #tpu.memory_space<vmem>>, %arg12: memref<1x512xf32, #tpu.memory_space<vmem>>, %arg13: memref<1x512xf32, #tpu.memory_space<vmem>>, %arg14: memref<8x512xf32, #tpu.memory_space<vmem>>, %arg15: memref<8x512xf32, #tpu.memory_space<vmem>>) attributes {dimension_semantics = [], scalar_prefetch = 0 : i64, scratch_operands = 0 : i64, tpu.core_type = #tpu.core_type<tc>} {
    %c0 = arith.constant 0 : index
    %c0_0 = arith.constant 0 : index
    %0 = vector.load %arg0[%c0, %c0_0] : memref<8x32xbf16, #tpu.memory_space<vmem>>, vector<8x32xbf16>
    %c0_1 = arith.constant 0 : index
    %c0_2 = arith.constant 0 : index
    %1 = vector.load %arg2[%c0_1, %c0_2] : memref<32x256xbf16, #tpu.memory_space<vmem>>, vector<32x256xbf16>
    %c0_3 = arith.constant 0 : index
    %c0_4 = arith.constant 0 : index
    %2 = vector.load %arg3[%c0_3, %c0_4] : memref<1x256xf32, #tpu.memory_space<vmem>>, vector<1x256xf32>
    %c0_5 = arith.constant 0 : index
    %c0_6 = arith.constant 0 : index
    %3 = vector.load %arg4[%c0_5, %c0_6] : memref<1x256xf32, #tpu.memory_space<vmem>>, vector<1x256xf32>
    %c0_7 = arith.constant 0 : index
    %c0_8 = arith.constant 0 : index
    %4 = vector.load %arg5[%c0_7, %c0_8] : memref<256x512xbf16, #tpu.memory_space<vmem>>, vector<256x512xbf16>
    %c0_9 = arith.constant 0 : index
    %c0_10 = arith.constant 0 : index
    %5 = vector.load %arg6[%c0_9, %c0_10] : memref<1x512xf32, #tpu.memory_space<vmem>>, vector<1x512xf32>
    %c0_11 = arith.constant 0 : index
    %c0_12 = arith.constant 0 : index
    %6 = vector.load %arg7[%c0_11, %c0_12] : memref<1x512xf32, #tpu.memory_space<vmem>>, vector<1x512xf32>
    %cst = arith.constant dense<0.000000e+00> : vector<8x256xf32>
    %7 = tpu.matmul %0, %1, %cst {dimension_numbers = #tpu.dot_dimension_numbers<[1], [0], [0], [1], [0, 0, 1, 1], [], []>} : vector<8x32xbf16>, vector<32x256xbf16>, vector<8x256xf32> -> vector<8x256xf32>
    %8 = vector.broadcast %2 : vector<1x256xf32> to vector<8x256xf32>
    %9 = arith.mulf %7, %8 : vector<8x256xf32>
    %10 = vector.broadcast %3 : vector<1x256xf32> to vector<8x256xf32>
    %11 = arith.addf %9, %10 : vector<8x256xf32>
    %cst_13 = arith.constant 0.000000e+00 : f32
    %12 = vector.broadcast %cst_13 : f32 to vector<8x256xf32>
    %13 = arith.maximumf %11, %12 : vector<8x256xf32>
    %14 = arith.truncf %13 : vector<8x256xf32> to vector<8x256xbf16>
    %cst_14 = arith.constant dense<0.000000e+00> : vector<8x512xf32>
    %15 = tpu.matmul %14, %4, %cst_14 {dimension_numbers = #tpu.dot_dimension_numbers<[1], [0], [0], [1], [0, 0, 1, 1], [], []>} : vector<8x256xbf16>, vector<256x512xbf16>, vector<8x512xf32> -> vector<8x512xf32>
    %16 = vector.broadcast %5 : vector<1x512xf32> to vector<8x512xf32>
    %17 = arith.mulf %15, %16 : vector<8x512xf32>
    %18 = vector.broadcast %6 : vector<1x512xf32> to vector<8x512xf32>
    %19 = arith.addf %17, %18 : vector<8x512xf32>
    %cst_15 = arith.constant 0.000000e+00 : f32
    %20 = vector.broadcast %cst_15 : f32 to vector<8x512xf32>
    %21 = arith.maximumf %19, %20 : vector<8x512xf32>
    %c0_16 = arith.constant 0 : index
    %c0_17 = arith.constant 0 : index
    %22 = vector.load %arg14[%c0_16, %c0_17] : memref<8x512xf32, #tpu.memory_space<vmem>>, vector<8x512xf32>
    tpu.vector_store %arg14[%c0_16, %c0_17], %21 {strides = array<i32>} : memref<8x512xf32, #tpu.memory_space<vmem>>, vector<8x512xf32>,
    %c0_18 = arith.constant 0 : index
    %c0_19 = arith.constant 0 : index
    %23 = vector.load %arg1[%c0_18, %c0_19] : memref<8x64xbf16, #tpu.memory_space<vmem>>, vector<8x64xbf16>
    %c0_20 = arith.constant 0 : index
    %c0_21 = arith.constant 0 : index
    %24 = vector.load %arg8[%c0_20, %c0_21] : memref<64x256xbf16, #tpu.memory_space<vmem>>, vector<64x256xbf16>
    %c0_22 = arith.constant 0 : index
    %c0_23 = arith.constant 0 : index
    %25 = vector.load %arg9[%c0_22, %c0_23] : memref<1x256xf32, #tpu.memory_space<vmem>>, vector<1x256xf32>
    %c0_24 = arith.constant 0 : index
    %c0_25 = arith.constant 0 : index
    %26 = vector.load %arg10[%c0_24, %c0_25] : memref<1x256xf32, #tpu.memory_space<vmem>>, vector<1x256xf32>
    %c0_26 = arith.constant 0 : index
    %c0_27 = arith.constant 0 : index
    %27 = vector.load %arg11[%c0_26, %c0_27] : memref<256x512xbf16, #tpu.memory_space<vmem>>, vector<256x512xbf16>
    %c0_28 = arith.constant 0 : index
    %c0_29 = arith.constant 0 : index
    %28 = vector.load %arg12[%c0_28, %c0_29] : memref<1x512xf32, #tpu.memory_space<vmem>>, vector<1x512xf32>
    %c0_30 = arith.constant 0 : index
    %c0_31 = arith.constant 0 : index
    %29 = vector.load %arg13[%c0_30, %c0_31] : memref<1x512xf32, #tpu.memory_space<vmem>>, vector<1x512xf32>
    %cst_32 = arith.constant dense<0.000000e+00> : vector<8x256xf32>
    %30 = tpu.matmul %23, %24, %cst_32 {dimension_numbers = #tpu.dot_dimension_numbers<[1], [0], [0], [1], [0, 0, 1, 1], [], []>} : vector<8x64xbf16>, vector<64x256xbf16>, vector<8x256xf32> -> vector<8x256xf32>
    %31 = vector.broadcast %25 : vector<1x256xf32> to vector<8x256xf32>
    %32 = arith.mulf %30, %31 : vector<8x256xf32>
    %33 = vector.broadcast %26 : vector<1x256xf32> to vector<8x256xf32>
    %34 = arith.addf %32, %33 : vector<8x256xf32>
    %cst_33 = arith.constant 0.000000e+00 : f32
    %35 = vector.broadcast %cst_33 : f32 to vector<8x256xf32>
    %36 = arith.maximumf %34, %35 : vector<8x256xf32>
    %37 = arith.truncf %36 : vector<8x256xf32> to vector<8x256xbf16>
    %cst_34 = arith.constant dense<0.000000e+00> : vector<8x512xf32>
    %38 = tpu.matmul %37, %27, %cst_34 {dimension_numbers = #tpu.dot_dimension_numbers<[1], [0], [0], [1], [0, 0, 1, 1], [], []>} : vector<8x256xbf16>, vector<256x512xbf16>, vector<8x512xf32> -> vector<8x512xf32>
    %39 = vector.broadcast %28 : vector<1x512xf32> to vector<8x512xf32>
    %40 = arith.mulf %38, %39 : vector<8x512xf32>
    %41 = vector.broadcast %29 : vector<1x512xf32> to vector<8x512xf32>
    %42 = arith.addf %40, %41 : vector<8x512xf32>
    %cst_35 = arith.constant 0.000000e+00 : f32
    %43 = vector.broadcast %cst_35 : f32 to vector<8x512xf32>
    %44 = arith.maximumf %42, %43 : vector<8x512xf32>
    %c0_36 = arith.constant 0 : index
    %c0_37 = arith.constant 0 : index
    %45 = vector.load %arg15[%c0_36, %c0_37] : memref<8x512xf32, #tpu.memory_space<vmem>>, vector<8x512xf32>
    tpu.vector_store %arg15[%c0_36, %c0_37], %44 {strides = array<i32>} : memref<8x512xf32, #tpu.memory_space<vmem>>, vector<8x512xf32>,
    return
  }
}

</mosaic_0001>

<llo_original>
// kernel: _unimodal_call.1
$region0: #{_unimodal_call.1}
  #allocation0 [shape = 'u32[]', space=smem, size = 0x4, offset = 0x4, fixed_abs, tag = 'smem constant byte address 0x4 - core index']
  #allocation1 [shape = 'u32[144,128]{1,0:T(1,128)}', space=vmem, size = 0x12000, scoped, tag = 'internal scratch']
  %s0 = inlined_call_operand.vmem [shape: bf16[8,32], index: 0, kind: input, shape index: {}]
  %s1 = inlined_call_operand.vmem [shape: bf16[8,64], index: 1, kind: input, shape index: {}]
  %s2 = inlined_call_operand.hbm [shape: bf16[32,256], index: 2, kind: input, shape index: {}]
  %s3 = inlined_call_operand.vmem [shape: f32[1,256], index: 3, kind: input, shape index: {}]
  %s4 = inlined_call_operand.vmem [shape: f32[1,256], index: 4, kind: input, shape index: {}]
  %s5 = inlined_call_operand.hbm [shape: bf16[256,512], index: 5, kind: input, shape index: {}]
  %s6 = inlined_call_operand.vmem [shape: f32[1,512], index: 6, kind: input, shape index: {}]
  %s7 = inlined_call_operand.vmem [shape: f32[1,512], index: 7, kind: input, shape index: {}]
  %s8 = inlined_call_operand.hbm [shape: bf16[64,256], index: 8, kind: input, shape index: {}]
  %s9 = inlined_call_operand.vmem [shape: f32[1,256], index: 9, kind: input, shape index: {}]
  %s10 = inlined_call_operand.vmem [shape: f32[1,256], index: 10, kind: input, shape index: {}]
  %s11 = inlined_call_operand.hbm [shape: bf16[256,512], index: 11, kind: input, shape index: {}]
  %s12 = inlined_call_operand.vmem [shape: f32[1,512], index: 12, kind: input, shape index: {}]
  %s13 = inlined_call_operand.vmem [shape: f32[1,512], index: 13, kind: input, shape index: {}]
  %s14 = inlined_call_operand.hbm [shape: f32[8,512], index: 14, kind: output, shape index: {0}]
  %s15 = inlined_call_operand.hbm [shape: f32[8,512], index: 15, kind: output, shape index: {1}]
  %16 = xla_tuple %s14, %s15
  %s17 = sld [smem:[#allocation0]]
  $region90: #{_unimodal_call.1} parent=0
    _
  %s19 = ssub.s32 1, %s17
  %s20 = scalar_select 0, %s19, %s17
  $region1: #{_unimodal_call.1} parent=0
    #allocation2 [shape = 'u8[16384]{0}', space=vmem, size = 0x4000, scoped, tag = 'input window, operand 2, single buffered']
    #allocation3 [shape = 's32[1]{0}', space=sflag, size = 0x4, scoped, tag = 'scoped memory for _unimodal_call.1']
    #allocation4 [shape = 's32[1]{0}', space=sflag, size = 0x4, scoped, tag = 'scoped memory for _unimodal_call.1']
    #allocation5 [shape = 'u8[262144]{0}', space=vmem, size = 0x40000, scoped, tag = 'input window, operand 5, single buffered']
    #allocation6 [shape = 's32[1]{0}', space=sflag, size = 0x4, scoped, tag = 'scoped memory for _unimodal_call.1']
    #allocation7 [shape = 'u8[32768]{0}', space=vmem, size = 0x8000, scoped, tag = 'input window, operand 8, single buffered']
    #allocation8 [shape = 'u8[262144]{0}', space=vmem, size = 0x40000, scoped, tag = 'input window, operand 11, single buffered']
    #allocation9 [shape = 's32[1]{0}', space=sflag, size = 0x4, scoped, tag = 'scoped memory for _unimodal_call.1']
    #allocation10 [shape = 'u8[16384]{0}', space=vmem, size = 0x4000, scoped, tag = 'output window, operand 0, single buffered']
    #allocation11 [shape = 'u8[16384]{0}', space=vmem, size = 0x4000, scoped, tag = 'output window, operand 1, single buffered']
    #allocation12 [shape = 's32[1]{0}', space=sflag, size = 0x4, scoped, tag = 'scoped memory for _unimodal_call.1']
    %21 = vsyncpa [#allocation3], 0
    %22 = vsyncpa [#allocation6], 0
    %23 = vsyncpa [#allocation9], 0
    %24 = vsyncpa [#allocation4], 0
    %25 = vsyncpa [#allocation12], 0
    // Predicated region
    $region2: #{_unimodal_call.1} parent=1 // pred_check
      _
    $region3: #{_unimodal_call.1} parent=1 // pred_check_branch
      %27 = sbr.rel (0) target = $region5
    $region4: #{_unimodal_call.1} parent=1 // pred_region
      _
    $region5: #{_unimodal_call.1} parent=1 // pred_fallthru
      _
    // Predicated region
    $region6: #{_unimodal_call.1} parent=1 // pred_check
      _
    $region7: #{_unimodal_call.1} parent=1 // pred_check_branch
      %29 = sbr.rel (0) target = $region9
    $region8: #{_unimodal_call.1} parent=1 // pred_region
      _
    $region9: #{_unimodal_call.1} parent=1 // pred_fallthru
      _
    // Predicated region
    $region10: #{_unimodal_call.1} parent=1 // pred_check
      _
    $region11: #{_unimodal_call.1} parent=1 // pred_check_branch
      %31 = sbr.rel (0) target = $region13
    $region12: #{_unimodal_call.1} parent=1 // pred_region
      %s33 = ssub.s32 512, 512
      %34 = vsyncadd [#allocation3], %s33
      %s35 = sshll.u32 [#allocation2], 4
      %s36 = int_to_ptr.vmem [resolvable:$true] %s35
      %41 = dma.hbm_to_vmem [thread:$0]  %s2, 512, %s36, [#allocation3], 128, 128, 8
    $region13: #{_unimodal_call.1} parent=1 // pred_fallthru
      _
    // Predicated region
    $region14: #{_unimodal_call.1} parent=1 // pred_check
      _
    $region15: #{_unimodal_call.1} parent=1 // pred_check_branch
      %43 = sbr.rel (0) target = $region17
    $region16: #{_unimodal_call.1} parent=1 // pred_region
      _
    $region17: #{_unimodal_call.1} parent=1 // pred_fallthru
      _
    // Predicated region
    $region18: #{_unimodal_call.1} parent=1 // pred_check
      _
    $region19: #{_unimodal_call.1} parent=1 // pred_check_branch
      %45 = sbr.rel (0) target = $region21
    $region20: #{_unimodal_call.1} parent=1 // pred_region
      _
    $region21: #{_unimodal_call.1} parent=1 // pred_fallthru
      _
    // Predicated region
    $region22: #{_unimodal_call.1} parent=1 // pred_check
      _
    $region23: #{_unimodal_call.1} parent=1 // pred_check_branch
      %47 = sbr.rel (0) target = $region25
    $region24: #{_unimodal_call.1} parent=1 // pred_region
      %s49 = ssub.s32 8192, 8192
      %50 = vsyncadd [#allocation6], %s49
      %s51 = sshll.u32 [#allocation5], 4
      %s52 = int_to_ptr.vmem [resolvable:$true] %s51
      %57 = dma.hbm_to_vmem [thread:$0]  %s5, 8192, %s52, [#allocation6], 256, 256, 16
    $region25: #{_unimodal_call.1} parent=1 // pred_fallthru
      _
    // Predicated region
    $region26: #{_unimodal_call.1} parent=1 // pred_check
      _
    $region27: #{_unimodal_call.1} parent=1 // pred_check_branch
      %59 = sbr.rel (0) target = $region29
    $region28: #{_unimodal_call.1} parent=1 // pred_region
      _
    $region29: #{_unimodal_call.1} parent=1 // pred_fallthru
      _
    // Predicated region
    $region30: #{_unimodal_call.1} parent=1 // pred_check
      _
    $region31: #{_unimodal_call.1} parent=1 // pred_check_branch
      %61 = sbr.rel (0) target = $region33
    $region32: #{_unimodal_call.1} parent=1 // pred_region
      _
    $region33: #{_unimodal_call.1} parent=1 // pred_fallthru
      _
    // Predicated region
    $region34: #{_unimodal_call.1} parent=1 // pred_check
      _
    $region35: #{_unimodal_call.1} parent=1 // pred_check_branch
      %63 = sbr.rel (0) target = $region37
    $region36: #{_unimodal_call.1} parent=1 // pred_region
      %s65 = ssub.s32 1024, 1024
      %66 = vsyncadd [#allocation6], %s65
      %s67 = sshll.u32 [#allocation7], 4
      %s68 = int_to_ptr.vmem [resolvable:$true] %s67
      %73 = dma.hbm_to_vmem [thread:$0]  %s8, 1024, %s68, [#allocation6], 128, 128, 8
    $region37: #{_unimodal_call.1} parent=1 // pred_fallthru
      _
    // Predicated region
    $region38: #{_unimodal_call.1} parent=1 // pred_check
      _
    $region39: #{_unimodal_call.1} parent=1 // pred_check_branch
      %75 = sbr.rel (0) target = $region41
    $region40: #{_unimodal_call.1} parent=1 // pred_region
      _
    $region41: #{_unimodal_call.1} parent=1 // pred_fallthru
      _
    // Predicated region
    $region42: #{_unimodal_call.1} parent=1 // pred_check
      _
    $region43: #{_unimodal_call.1} parent=1 // pred_check_branch
      %77 = sbr.rel (0) target = $region45
    $region44: #{_unimodal_call.1} parent=1 // pred_region
      _
    $region45: #{_unimodal_call.1} parent=1 // pred_fallthru
      _
    // Predicated region
    $region46: #{_unimodal_call.1} parent=1 // pred_check
      _
    $region47: #{_unimodal_call.1} parent=1 // pred_check_branch
      %79 = sbr.rel (0) target = $region49
    $region48: #{_unimodal_call.1} parent=1 // pred_region
      %s81 = ssub.s32 8192, 8192
      %82 = vsyncadd [#allocation9], %s81
      %s83 = sshll.u32 [#allocation8], 4
      %s84 = int_to_ptr.vmem [resolvable:$true] %s83
      %89 = dma.hbm_to_vmem [thread:$0]  %s11, 8192, %s84, [#allocation9], 256, 256, 16
    $region49: #{_unimodal_call.1} parent=1 // pred_fallthru
      _
    // Predicated region
    $region50: #{_unimodal_call.1} parent=1 // pred_check
      _
    $region51: #{_unimodal_call.1} parent=1 // pred_check_branch
      %91 = sbr.rel (0) target = $region53
    $region52: #{_unimodal_call.1} parent=1 // pred_region
      _
    $region53: #{_unimodal_call.1} parent=1 // pred_fallthru
      _
    // Predicated region
    $region54: #{_unimodal_call.1} parent=1 // pred_check
      _
    $region55: #{_unimodal_call.1} parent=1 // pred_check_branch
      %93 = sbr.rel (0) target = $region57
    $region56: #{_unimodal_call.1} parent=1 // pred_region
      _
    $region57: #{_unimodal_call.1} parent=1 // pred_fallthru
      _
    // Predicated region
    $region58: #{_unimodal_call.1} parent=1 // pred_check
      _
    $region59: #{_unimodal_call.1} parent=1 // pred_check_branch
      %95 = sbr.rel (0) target = $region61
    $region60: #{_unimodal_call.1} parent=1 // pred_region
      %96 = dma.done [#allocation3], 512
    $region61: #{_unimodal_call.1} parent=1 // pred_fallthru
      _
    // Predicated region
    $region62: #{_unimodal_call.1} parent=1 // pred_check
      _
    $region63: #{_unimodal_call.1} parent=1 // pred_check_branch
      %98 = sbr.rel (0) target = $region65
    $region64: #{_unimodal_call.1} parent=1 // pred_region
      %99 = dma.done [#allocation6], 8192
    $region65: #{_unimodal_call.1} parent=1 // pred_fallthru
      _
    // Predicated region
    $region66: #{_unimodal_call.1} parent=1 // pred_check
      _
    $region67: #{_unimodal_call.1} parent=1 // pred_check_branch
      %101 = sbr.rel (0) target = $region69
    $region68: #{_unimodal_call.1} parent=1 // pred_region
      %102 = dma.done [#allocation6], 1024
    $region69: #{_unimodal_call.1} parent=1 // pred_fallthru
      _
    // Predicated region
    $region70: #{_unimodal_call.1} parent=1 // pred_check
      _
    $region71: #{_unimodal_call.1} parent=1 // pred_check_branch
      %104 = sbr.rel (0) target = $region73
    $region72: #{_unimodal_call.1} parent=1 // pred_region
      %105 = dma.done [#allocation9], 8192
    $region73: #{_unimodal_call.1} parent=1 // pred_fallthru
      _
    %v107 = vld [vmem:[%s0] sm:$0xf]
    %v108 = vld [vmem:[#allocation2] sm:$0xff]
    %v109 = vld [vmem:[#allocation2 + $0x8] sm:$0xff]
    %v110 = vld [vmem:[#allocation2 + $0x10] sm:$0xff]
    %v111 = vld [vmem:[#allocation2 + $0x18] sm:$0xff]
    %v112 = vld [vmem:[%s3] sm:$0x3]
    %v113 = vld [vmem:[%s4] sm:$0x3]
    %v114 = vld [vmem:[#allocation5] sm:$0xff]
    %v115 = vld [vmem:[#allocation5 + $0x8] sm:$0xff]
    %v116 = vld [vmem:[#allocation5 + $0x10] sm:$0xff]
    %v117 = vld [vmem:[#allocation5 + $0x18] sm:$0xff]
    %v118 = vld [vmem:[#allocation5 + $0x20] sm:$0xff]
    %v119 = vld [vmem:[#allocation5 + $0x28] sm:$0xff]
    %v120 = vld [vmem:[#allocation5 + $0x30] sm:$0xff]
    %v121 = vld [vmem:[#allocation5 + $0x38] sm:$0xff]
    %v122 = vld [vmem:[#allocation5 + $0x40] sm:$0xff]
    %v123 = vld [vmem:[#allocation5 + $0x48] sm:$0xff]
    %v124 = vld [vmem:[#allocation5 + $0x50] sm:$0xff]
    %v125 = vld [vmem:[#allocation5 + $0x58] sm:$0xff]
    %v126 = vld [vmem:[#allocation5 + $0x60] sm:$0xff]
    %v127 = vld [vmem:[#allocation5 + $0x68] sm:$0xff]
    %v128 = vld [vmem:[#allocation5 + $0x70] sm:$0xff]
    %v129 = vld [vmem:[#allocation5 + $0x78] sm:$0xff]
    %v130 = vld [vmem:[#allocation5 + $0x80] sm:$0xff]
    %v131 = vld [vmem:[#allocation5 + $0x88] sm:$0xff]
    %v132 = vld [vmem:[#allocation5 + $0x90] sm:$0xff]
    %v133 = vld [vmem:[#allocation5 + $0x98] sm:$0xff]
    %v134 = vld [vmem:[#allocation5 + $0xa0] sm:$0xff]
    %v135 = vld [vmem:[#allocation5 + $0xa8] sm:$0xff]
    %v136 = vld [vmem:[#allocation5 + $0xb0] sm:$0xff]
    %v137 = vld [vmem:[#allocation5 + $0xb8] sm:$0xff]
    %v138 = vld [vmem:[#allocation5 + $0xc0] sm:$0xff]
    %v139 = vld [vmem:[#allocation5 + $0xc8] sm:$0xff]
    %v140 = vld [vmem:[#allocation5 + $0xd0] sm:$0xff]
    %v141 = vld [vmem:[#allocation5 + $0xd8] sm:$0xff]
    %v142 = vld [vmem:[#allocation5 + $0xe0] sm:$0xff]
    %v143 = vld [vmem:[#allocation5 + $0xe8] sm:$0xff]
    %v144 = vld [vmem:[#allocation5 + $0xf0] sm:$0xff]
    %v145 = vld [vmem:[#allocation5 + $0xf8] sm:$0xff]
    %v146 = vld [vmem:[#allocation5 + $0x100] sm:$0xff]
    %v147 = vld [vmem:[#allocation5 + $0x108] sm:$0xff]
    %v148 = vld [vmem:[#allocation5 + $0x110] sm:$0xff]
    %v149 = vld [vmem:[#allocation5 + $0x118] sm:$0xff]
    %v150 = vld [vmem:[#allocation5 + $0x120] sm:$0xff]
    %v151 = vld [vmem:[#allocation5 + $0x128] sm:$0xff]
    %v152 = vld [vmem:[#allocation5 + $0x130] sm:$0xff]
    %v153 = vld [vmem:[#allocation5 + $0x138] sm:$0xff]
    %v154 = vld [vmem:[#allocation5 + $0x140] sm:$0xff]
    %v155 = vld [vmem:[#allocation5 + $0x148] sm:$0xff]
    %v156 = vld [vmem:[#allocation5 + $0x150] sm:$0xff]
    %v157 = vld [vmem:[#allocation5 + $0x158] sm:$0xff]
    %v158 = vld [vmem:[#allocation5 + $0x160] sm:$0xff]
    %v159 = vld [vmem:[#allocation5 + $0x168] sm:$0xff]
    %v160 = vld [vmem:[#allocation5 + $0x170] sm:$0xff]
    %v161 = vld [vmem:[#allocation5 + $0x178] sm:$0xff]
    %v162 = vld [vmem:[#allocation5 + $0x180] sm:$0xff]
    %v163 = vld [vmem:[#allocation5 + $0x188] sm:$0xff]
    %v164 = vld [vmem:[#allocation5 + $0x190] sm:$0xff]
    %v165 = vld [vmem:[#allocation5 + $0x198] sm:$0xff]
    %v166 = vld [vmem:[#allocation5 + $0x1a0] sm:$0xff]
    %v167 = vld [vmem:[#allocation5 + $0x1a8] sm:$0xff]
    %v168 = vld [vmem:[#allocation5 + $0x1b0] sm:$0xff]
    %v169 = vld [vmem:[#allocation5 + $0x1b8] sm:$0xff]
    %v170 = vld [vmem:[#allocation5 + $0x1c0] sm:$0xff]
    %v171 = vld [vmem:[#allocation5 + $0x1c8] sm:$0xff]
    %v172 = vld [vmem:[#allocation5 + $0x1d0] sm:$0xff]
    %v173 = vld [vmem:[#allocation5 + $0x1d8] sm:$0xff]
    %v174 = vld [vmem:[#allocation5 + $0x1e0] sm:$0xff]
    %v175 = vld [vmem:[#allocation5 + $0x1e8] sm:$0xff]
    %v176 = vld [vmem:[#allocation5 + $0x1f0] sm:$0xff]
    %v177 = vld [vmem:[#allocation5 + $0x1f8] sm:$0xff]
    %v178 = vld [vmem:[%s6] sm:$0xf]
    %v179 = vld [vmem:[%s7] sm:$0xf]
    %v184 = vunpack.c.l.b16 %v108
    %v185 = vunpack.c.h.b16 %v108
    %v186 = vunpack.c.l.b16 %v109
    %v187 = vunpack.c.h.b16 %v109
    %v188 = vunpack.c.l.b16 %v110
    %v189 = vunpack.c.h.b16 %v110
    %v190 = vunpack.c.l.b16 %v111
    %v191 = vunpack.c.h.b16 %v111
    %v192 = vpack.c.b16 %v186, %v184
    %v193 = vpack.c.b16 %v187, %v185
    %v194 = vpack.c.b16 %v190, %v188
    %v195 = vpack.c.b16 %v191, %v189
    %vm200 = vcmask 261120
    %v202 = vsel %vm200, %v107, 0
    %204 = vmatprep.subr.bf16.mxu0 0
    %205 = vmatpush1.bf16.msra.mxu0 0
    %206 = vmatprep.subr.bf16.mxu0 0
    %207 = vmatpush1.bf16.msra.mxu0 0
    %208 = vmatprep.subr.bf16.mxu0 0
    %209 = vmatpush1.bf16.msra.mxu0 0
    %210 = vmatprep.subr.bf16.mxu0 0
    %211 = vmatpush1.bf16.msra.mxu0 0
    %212 = vmatprep.subr.bf16.mxu0 0
    %213 = vmatpush1.bf16.msra.mxu0 0
    %214 = vmatprep.subr.bf16.mxu0 0
    %215 = vmatpush1.bf16.msra.mxu0 0
    %216 = vmatprep.subr.bf16.mxu0 %v195
    %217 = vmatpush1.bf16.msra.mxu0 %v194
    %218 = vmatprep.subr.bf16.mxu0 %v193
    %219 = vmatpush1.bf16.msra.mxu0 %v192
    %220 = vmatprep.subr.bf16.mxu0 0
    %221 = vmatpush2.bf16.msra.mxu0 0
    %222 = vmatprep.subr.bf16.mxu0 0
    %223 = vmatpush2.bf16.msra.mxu0 0
    %224 = vmatprep.subr.bf16.mxu0 0
    %225 = vmatpush2.bf16.msra.mxu0 0
    %226 = vmatprep.subr.bf16.mxu0 0
    %227 = vmatpush2.bf16.msra.mxu0 0
    %228 = vmatprep.subr.bf16.mxu0 0
    %229 = vmatpush2.bf16.msra.mxu0 0
    %230 = vmatprep.subr.bf16.mxu0 0
    %231 = vmatpush2.bf16.msra.mxu0 0
    %232 = vmatprep.subr.bf16.mxu0 0
    %233 = vmatpush2.bf16.msra.mxu0 0
    %234 = vmatprep.subr.bf16.mxu0 0
    %235 = vmatpush2.bf16.msra.mxu0 0
    %236 = vmatprep.mubr.bf16.mxu0 0
    %237 = vmatmul.mubr.bf16.gmra.mxu0 %v202
    %v238 = vpop.f32.mrf.mxu0
    %v239 = vadd.f32 0.0, %v238
    %v240 = vpop.f32.mrf.mxu0
    %v241 = vadd.f32 0.0, %v240
    %v242 = vpop.f32.mrf.mxu0
    %v243 = vpop.f32.mrf.mxu0
    %244 = vdwg.mxu0
    %v246 = vlaneseq
    %v247 = vshrl.u32 %v246, 7
    %v248 = vsub.s32 0, %v247
    %v249 = vrot.slane %v112, %v248
    %v250 = vlaneseq
    %v251 = vshrl.u32 %v250, 7
    %v252 = vsub.s32 1, %v251
    %v253 = vrot.slane %v112, %v252
    %v256 = vmul.f32 %v239, %v249
    %v257 = vmul.f32 %v241, %v253
    %v259 = vlaneseq
    %v260 = vshrl.u32 %v259, 7
    %v261 = vsub.s32 0, %v260
    %v262 = vrot.slane %v113, %v261
    %v263 = vlaneseq
    %v264 = vshrl.u32 %v263, 7
    %v265 = vsub.s32 1, %v264
    %v266 = vrot.slane %v113, %v265
    %v269 = vadd.f32 %v256, %v262
    %v270 = vadd.f32 %v257, %v266
    %v271 = vmax.f32 %v269, 0.0
    %v272 = vmax.f32 %v270, 0.0
    %v273 = vpack.c.bf16 %v271, %v271
    %v274 = vpack.c.bf16 %v272, %v272
    %v339 = vunpack.c.l.b16 %v114
    %v340 = vunpack.c.h.b16 %v114
    %v341 = vunpack.c.l.b16 %v115
    %v342 = vunpack.c.h.b16 %v115
    %v343 = vunpack.c.l.b16 %v116
    %v344 = vunpack.c.h.b16 %v116
    %v345 = vunpack.c.l.b16 %v117
    %v346 = vunpack.c.h.b16 %v117
    %v347 = vunpack.c.l.b16 %v118
    %v348 = vunpack.c.h.b16 %v118
    %v349 = vunpack.c.l.b16 %v119
    %v350 = vunpack.c.h.b16 %v119
    %v351 = vunpack.c.l.b16 %v120
    %v352 = vunpack.c.h.b16 %v120
    %v353 = vunpack.c.l.b16 %v121
    %v354 = vunpack.c.h.b16 %v121
    %v355 = vunpack.c.l.b16 %v122
    %v356 = vunpack.c.h.b16 %v122
    %v357 = vunpack.c.l.b16 %v123
    %v358 = vunpack.c.h.b16 %v123
    %v359 = vunpack.c.l.b16 %v124
    %v360 = vunpack.c.h.b16 %v124
    %v361 = vunpack.c.l.b16 %v125
    %v362 = vunpack.c.h.b16 %v125
    %v363 = vunpack.c.l.b16 %v126
    %v364 = vunpack.c.h.b16 %v126
    %v365 = vunpack.c.l.b16 %v127
    %v366 = vunpack.c.h.b16 %v127
    %v367 = vunpack.c.l.b16 %v128
    %v368 = vunpack.c.h.b16 %v128
    %v369 = vunpack.c.l.b16 %v129
    %v370 = vunpack.c.h.b16 %v129
    %v371 = vunpack.c.l.b16 %v130
    %v372 = vunpack.c.h.b16 %v130
    %v373 = vunpack.c.l.b16 %v131
    %v374 = vunpack.c.h.b16 %v131
    %v375 = vunpack.c.l.b16 %v132
    %v376 = vunpack.c.h.b16 %v132
    %v377 = vunpack.c.l.b16 %v133
    %v378 = vunpack.c.h.b16 %v133
    %v379 = vunpack.c.l.b16 %v134
    %v380 = vunpack.c.h.b16 %v134
    %v381 = vunpack.c.l.b16 %v135
    %v382 = vunpack.c.h.b16 %v135
    %v383 = vunpack.c.l.b16 %v136
    %v384 = vunpack.c.h.b16 %v136
    %v385 = vunpack.c.l.b16 %v137
    %v386 = vunpack.c.h.b16 %v137
    %v387 = vunpack.c.l.b16 %v138
    %v388 = vunpack.c.h.b16 %v138
    %v389 = vunpack.c.l.b16 %v139
    %v390 = vunpack.c.h.b16 %v139
    %v391 = vunpack.c.l.b16 %v140
    %v392 = vunpack.c.h.b16 %v140
    %v393 = vunpack.c.l.b16 %v141
    %v394 = vunpack.c.h.b16 %v141
    %v395 = vunpack.c.l.b16 %v142
    %v396 = vunpack.c.h.b16 %v142
    %v397 = vunpack.c.l.b16 %v143
    %v398 = vunpack.c.h.b16 %v143
    %v399 = vunpack.c.l.b16 %v144
    %v400 = vunpack.c.h.b16 %v144
    %v401 = vunpack.c.l.b16 %v145
    %v402 = vunpack.c.h.b16 %v145
    %v403 = vunpack.c.l.b16 %v146
    %v404 = vunpack.c.h.b16 %v146
    %v405 = vunpack.c.l.b16 %v147
    %v406 = vunpack.c.h.b16 %v147
    %v407 = vunpack.c.l.b16 %v148
    %v408 = vunpack.c.h.b16 %v148
    %v409 = vunpack.c.l.b16 %v149
    %v410 = vunpack.c.h.b16 %v149
    %v411 = vunpack.c.l.b16 %v150
    %v412 = vunpack.c.h.b16 %v150
    %v413 = vunpack.c.l.b16 %v151
    %v414 = vunpack.c.h.b16 %v151
    %v415 = vunpack.c.l.b16 %v152
    %v416 = vunpack.c.h.b16 %v152
    %v417 = vunpack.c.l.b16 %v153
    %v418 = vunpack.c.h.b16 %v153
    %v419 = vunpack.c.l.b16 %v154
    %v420 = vunpack.c.h.b16 %v154
    %v421 = vunpack.c.l.b16 %v155
    %v422 = vunpack.c.h.b16 %v155
    %v423 = vunpack.c.l.b16 %v156
    %v424 = vunpack.c.h.b16 %v156
    %v425 = vunpack.c.l.b16 %v157
    %v426 = vunpack.c.h.b16 %v157
    %v427 = vunpack.c.l.b16 %v158
    %v428 = vunpack.c.h.b16 %v158
    %v429 = vunpack.c.l.b16 %v159
    %v430 = vunpack.c.h.b16 %v159
    %v431 = vunpack.c.l.b16 %v160
    %v432 = vunpack.c.h.b16 %v160
    %v433 = vunpack.c.l.b16 %v161
    %v434 = vunpack.c.h.b16 %v161
    %v435 = vunpack.c.l.b16 %v162
    %v436 = vunpack.c.h.b16 %v162
    %v437 = vunpack.c.l.b16 %v163
    %v438 = vunpack.c.h.b16 %v163
    %v439 = vunpack.c.l.b16 %v164
    %v440 = vunpack.c.h.b16 %v164
    %v441 = vunpack.c.l.b16 %v165
    %v442 = vunpack.c.h.b16 %v165
    %v443 = vunpack.c.l.b16 %v166
    %v444 = vunpack.c.h.b16 %v166
    %v445 = vunpack.c.l.b16 %v167
    %v446 = vunpack.c.h.b16 %v167
    %v447 = vunpack.c.l.b16 %v168
    %v448 = vunpack.c.h.b16 %v168
    %v449 = vunpack.c.l.b16 %v169
    %v450 = vunpack.c.h.b16 %v169
    %v451 = vunpack.c.l.b16 %v170
    %v452 = vunpack.c.h.b16 %v170
    %v453 = vunpack.c.l.b16 %v171
    %v454 = vunpack.c.h.b16 %v171
    %v455 = vunpack.c.l.b16 %v172
    %v456 = vunpack.c.h.b16 %v172
    %v457 = vunpack.c.l.b16 %v173
    %v458 = vunpack.c.h.b16 %v173
    %v459 = vunpack.c.l.b16 %v174
    %v460 = vunpack.c.h.b16 %v174
    %v461 = vunpack.c.l.b16 %v175
    %v462 = vunpack.c.h.b16 %v175
    %v463 = vunpack.c.l.b16 %v176
    %v464 = vunpack.c.h.b16 %v176
    %v465 = vunpack.c.l.b16 %v177
    %v466 = vunpack.c.h.b16 %v177
    %v467 = vpack.c.b16 %v343, %v339
    %v468 = vpack.c.b16 %v344, %v340
    %v469 = vpack.c.b16 %v345, %v341
    %v470 = vpack.c.b16 %v346, %v342
    %v471 = vpack.c.b16 %v351, %v347
    %v472 = vpack.c.b16 %v352, %v348
    %v473 = vpack.c.b16 %v353, %v349
    %v474 = vpack.c.b16 %v354, %v350
    %v475 = vpack.c.b16 %v359, %v355
    %v476 = vpack.c.b16 %v360, %v356
    %v477 = vpack.c.b16 %v361, %v357
    %v478 = vpack.c.b16 %v362, %v358
    %v479 = vpack.c.b16 %v367, %v363
    %v480 = vpack.c.b16 %v368, %v364
    %v481 = vpack.c.b16 %v369, %v365
    %v482 = vpack.c.b16 %v370, %v366
    %v483 = vpack.c.b16 %v375, %v371
    %v484 = vpack.c.b16 %v376, %v372
    %v485 = vpack.c.b16 %v377, %v373
    %v486 = vpack.c.b16 %v378, %v374
    %v487 = vpack.c.b16 %v383, %v379
    %v488 = vpack.c.b16 %v384, %v380
    %v489 = vpack.c.b16 %v385, %v381
    %v490 = vpack.c.b16 %v386, %v382
    %v491 = vpack.c.b16 %v391, %v387
    %v492 = vpack.c.b16 %v392, %v388
    %v493 = vpack.c.b16 %v393, %v389
    %v494 = vpack.c.b16 %v394, %v390
    %v495 = vpack.c.b16 %v399, %v395
    %v496 = vpack.c.b16 %v400, %v396
    %v497 = vpack.c.b16 %v401, %v397
    %v498 = vpack.c.b16 %v402, %v398
    %v499 = vpack.c.b16 %v407, %v403
    %v500 = vpack.c.b16 %v408, %v404
    %v501 = vpack.c.b16 %v409, %v405
    %v502 = vpack.c.b16 %v410, %v406
    %v503 = vpack.c.b16 %v415, %v411
    %v504 = vpack.c.b16 %v416, %v412
    %v505 = vpack.c.b16 %v417, %v413
    %v506 = vpack.c.b16 %v418, %v414
    %v507 = vpack.c.b16 %v423, %v419
    %v508 = vpack.c.b16 %v424, %v420
    %v509 = vpack.c.b16 %v425, %v421
    %v510 = vpack.c.b16 %v426, %v422
    %v511 = vpack.c.b16 %v431, %v427
    %v512 = vpack.c.b16 %v432, %v428
    %v513 = vpack.c.b16 %v433, %v429
    %v514 = vpack.c.b16 %v434, %v430
    %v515 = vpack.c.b16 %v439, %v435
    %v516 = vpack.c.b16 %v440, %v436
    %v517 = vpack.c.b16 %v441, %v437
    %v518 = vpack.c.b16 %v442, %v438
    %v519 = vpack.c.b16 %v447, %v443
    %v520 = vpack.c.b16 %v448, %v444
    %v521 = vpack.c.b16 %v449, %v445
    %v522 = vpack.c.b16 %v450, %v446
    %v523 = vpack.c.b16 %v455, %v451
    %v524 = vpack.c.b16 %v456, %v452
    %v525 = vpack.c.b16 %v457, %v453
    %v526 = vpack.c.b16 %v458, %v454
    %v527 = vpack.c.b16 %v463, %v459
    %v528 = vpack.c.b16 %v464, %v460
    %v529 = vpack.c.b16 %v465, %v461
    %v530 = vpack.c.b16 %v466, %v462
    %595 = vmatprep.subr.bf16.mxu0 %v496
    %596 = vmatpush1.bf16.msra.mxu0 %v495
    %597 = vmatprep.subr.bf16.mxu0 %v492
    %598 = vmatpush1.bf16.msra.mxu0 %v491
    %599 = vmatprep.subr.bf16.mxu0 %v488
    %600 = vmatpush1.bf16.msra.mxu0 %v487
    %601 = vmatprep.subr.bf16.mxu0 %v484
    %602 = vmatpush1.bf16.msra.mxu0 %v483
    %603 = vmatprep.subr.bf16.mxu0 %v480
    %604 = vmatpush1.bf16.msra.mxu0 %v479
    %605 = vmatprep.subr.bf16.mxu0 %v476
    %606 = vmatpush1.bf16.msra.mxu0 %v475
    %607 = vmatprep.subr.bf16.mxu0 %v472
    %608 = vmatpush1.bf16.msra.mxu0 %v471
    %609 = vmatprep.subr.bf16.mxu0 %v468
    %610 = vmatpush1.bf16.msra.mxu0 %v467
    %611 = vmatprep.subr.bf16.mxu0 %v528
    %612 = vmatpush2.bf16.msra.mxu0 %v527
    %613 = vmatprep.subr.bf16.mxu0 %v524
    %614 = vmatpush2.bf16.msra.mxu0 %v523
    %615 = vmatprep.subr.bf16.mxu0 %v520
    %616 = vmatpush2.bf16.msra.mxu0 %v519
    %617 = vmatprep.subr.bf16.mxu0 %v516
    %618 = vmatpush2.bf16.msra.mxu0 %v515
    %619 = vmatprep.subr.bf16.mxu0 %v512
    %620 = vmatpush2.bf16.msra.mxu0 %v511
    %621 = vmatprep.subr.bf16.mxu0 %v508
    %622 = vmatpush2.bf16.msra.mxu0 %v507
    %623 = vmatprep.subr.bf16.mxu0 %v504
    %624 = vmatpush2.bf16.msra.mxu0 %v503
    %625 = vmatprep.subr.bf16.mxu0 %v500
    %626 = vmatpush2.bf16.msra.mxu0 %v499
    %627 = vmatprep.mubr.bf16.mxu0 %v274
    %628 = vmatmul.mubr.bf16.gmra.mxu0 %v273
    %v629 = vpop.f32.mrf.mxu0
    %v630 = vadd.f32 0.0, %v629
    %v631 = vpop.f32.mrf.mxu0
    %v632 = vadd.f32 0.0, %v631
    %v633 = vpop.f32.mrf.mxu0
    %v634 = vpop.f32.mrf.mxu0
    %635 = vdwg.mxu0
    %636 = vmatprep.subr.bf16.mxu0 %v498
    %637 = vmatpush1.bf16.msra.mxu0 %v497
    %638 = vmatprep.subr.bf16.mxu0 %v494
    %639 = vmatpush1.bf16.msra.mxu0 %v493
    %640 = vmatprep.subr.bf16.mxu0 %v490
    %641 = vmatpush1.bf16.msra.mxu0 %v489
    %642 = vmatprep.subr.bf16.mxu0 %v486
    %643 = vmatpush1.bf16.msra.mxu0 %v485
    %644 = vmatprep.subr.bf16.mxu0 %v482
    %645 = vmatpush1.bf16.msra.mxu0 %v481
    %646 = vmatprep.subr.bf16.mxu0 %v478
    %647 = vmatpush1.bf16.msra.mxu0 %v477
    %648 = vmatprep.subr.bf16.mxu0 %v474
    %649 = vmatpush1.bf16.msra.mxu0 %v473
    %650 = vmatprep.subr.bf16.mxu0 %v470
    %651 = vmatpush1.bf16.msra.mxu0 %v469
    %652 = vmatprep.subr.bf16.mxu0 %v530
    %653 = vmatpush2.bf16.msra.mxu0 %v529
    %654 = vmatprep.subr.bf16.mxu0 %v526
    %655 = vmatpush2.bf16.msra.mxu0 %v525
    %656 = vmatprep.subr.bf16.mxu0 %v522
    %657 = vmatpush2.bf16.msra.mxu0 %v521
    %658 = vmatprep.subr.bf16.mxu0 %v518
    %659 = vmatpush2.bf16.msra.mxu0 %v517
    %660 = vmatprep.subr.bf16.mxu0 %v514
    %661 = vmatpush2.bf16.msra.mxu0 %v513
    %662 = vmatprep.subr.bf16.mxu0 %v510
    %663 = vmatpush2.bf16.msra.mxu0 %v509
    %664 = vmatprep.subr.bf16.mxu0 %v506
    %665 = vmatpush2.bf16.msra.mxu0 %v505
    %666 = vmatprep.subr.bf16.mxu0 %v502
    %667 = vmatpush2.bf16.msra.mxu0 %v501
    %668 = vmatprep.mubr.bf16.mxu0 %v274
    %669 = vmatmul.mubr.bf16.gmra.mxu0 %v273
    %v670 = vpop.f32.mrf.mxu0
    %v671 = vadd.f32 0.0, %v670
    %v672 = vpop.f32.mrf.mxu0
    %v673 = vadd.f32 0.0, %v672
    %v674 = vpop.f32.mrf.mxu0
    %v675 = vpop.f32.mrf.mxu0
    %676 = vdwg.mxu0
    %v678 = vlaneseq
    %v679 = vshrl.u32 %v678, 7
    %v680 = vsub.s32 0, %v679
    %v681 = vrot.slane %v178, %v680
    %v682 = vlaneseq
    %v683 = vshrl.u32 %v682, 7
    %v684 = vsub.s32 1, %v683
    %v685 = vrot.slane %v178, %v684
    %v686 = vlaneseq
    %v687 = vshrl.u32 %v686, 7
    %v688 = vsub.s32 2, %v687
    %v689 = vrot.slane %v178, %v688
    %v690 = vlaneseq
    %v691 = vshrl.u32 %v690, 7
    %v692 = vsub.s32 3, %v691
    %v693 = vrot.slane %v178, %v692
    %v698 = vmul.f32 %v630, %v681
    %v699 = vmul.f32 %v632, %v685
    %v700 = vmul.f32 %v671, %v689
    %v701 = vmul.f32 %v673, %v693
    %v703 = vlaneseq
    %v704 = vshrl.u32 %v703, 7
    %v705 = vsub.s32 0, %v704
    %v706 = vrot.slane %v179, %v705
    %v707 = vlaneseq
    %v708 = vshrl.u32 %v707, 7
    %v709 = vsub.s32 1, %v708
    %v710 = vrot.slane %v179, %v709
    %v711 = vlaneseq
    %v712 = vshrl.u32 %v711, 7
    %v713 = vsub.s32 2, %v712
    %v714 = vrot.slane %v179, %v713
    %v715 = vlaneseq
    %v716 = vshrl.u32 %v715, 7
    %v717 = vsub.s32 3, %v716
    %v718 = vrot.slane %v179, %v717
    %v723 = vadd.f32 %v698, %v706
    %v724 = vadd.f32 %v699, %v710
    %v725 = vadd.f32 %v700, %v714
    %v726 = vadd.f32 %v701, %v718
    %v727 = vmax.f32 %v723, 0.0
    %v728 = vmax.f32 %v724, 0.0
    %v729 = vmax.f32 %v725, 0.0
    %v730 = vmax.f32 %v726, 0.0
    %731 = vst [vmem:[#allocation10] sm:$0xff] %v727
    %732 = vst [vmem:[#allocation10 + $0x8] sm:$0xff] %v728
    %733 = vst [vmem:[#allocation10 + $0x10] sm:$0xff] %v729
    %734 = vst [vmem:[#allocation10 + $0x18] sm:$0xff] %v730
    %v735 = vld [vmem:[%s1] sm:$0xf]
    %v736 = vld [vmem:[#allocation7] sm:$0xff]
    %v737 = vld [vmem:[#allocation7 + $0x8] sm:$0xff]
    %v738 = vld [vmem:[#allocation7 + $0x10] sm:$0xff]
    %v739 = vld [vmem:[#allocation7 + $0x18] sm:$0xff]
    %v740 = vld [vmem:[#allocation7 + $0x20] sm:$0xff]
    %v741 = vld [vmem:[#allocation7 + $0x28] sm:$0xff]
    %v742 = vld [vmem:[#allocation7 + $0x30] sm:$0xff]
    %v743 = vld [vmem:[#allocation7 + $0x38] sm:$0xff]
    %v744 = vld [vmem:[%s9] sm:$0x3]
    %v745 = vld [vmem:[%s10] sm:$0x3]
    %v746 = vld [vmem:[#allocation8] sm:$0xff]
    %v747 = vld [vmem:[#allocation8 + $0x8] sm:$0xff]
    %v748 = vld [vmem:[#allocation8 + $0x10] sm:$0xff]
    %v749 = vld [vmem:[#allocation8 + $0x18] sm:$0xff]
    %v750 = vld [vmem:[#allocation8 + $0x20] sm:$0xff]
    %v751 = vld [vmem:[#allocation8 + $0x28] sm:$0xff]
    %v752 = vld [vmem:[#allocation8 + $0x30] sm:$0xff]
    %v753 = vld [vmem:[#allocation8 + $0x38] sm:$0xff]
    %v754 = vld [vmem:[#allocation8 + $0x40] sm:$0xff]
    %v755 = vld [vmem:[#allocation8 + $0x48] sm:$0xff]
    %v756 = vld [vmem:[#allocation8 + $0x50] sm:$0xff]
    %v757 = vld [vmem:[#allocation8 + $0x58] sm:$0xff]
    %v758 = vld [vmem:[#allocation8 + $0x60] sm:$0xff]
    %v759 = vld [vmem:[#allocation8 + $0x68] sm:$0xff]
    %v760 = vld [vmem:[#allocation8 + $0x70] sm:$0xff]
    %v761 = vld [vmem:[#allocation8 + $0x78] sm:$0xff]
    %v762 = vld [vmem:[#allocation8 + $0x80] sm:$0xff]
    %v763 = vld [vmem:[#allocation8 + $0x88] sm:$0xff]
    %v764 = vld [vmem:[#allocation8 + $0x90] sm:$0xff]
    %v765 = vld [vmem:[#allocation8 + $0x98] sm:$0xff]
    %v766 = vld [vmem:[#allocation8 + $0xa0] sm:$0xff]
    %v767 = vld [vmem:[#allocation8 + $0xa8] sm:$0xff]
    %v768 = vld [vmem:[#allocation8 + $0xb0] sm:$0xff]
    %v769 = vld [vmem:[#allocation8 + $0xb8] sm:$0xff]
    %v770 = vld [vmem:[#allocation8 + $0xc0] sm:$0xff]
    %v771 = vld [vmem:[#allocation8 + $0xc8] sm:$0xff]
    %v772 = vld [vmem:[#allocation8 + $0xd0] sm:$0xff]
    %v773 = vld [vmem:[#allocation8 + $0xd8] sm:$0xff]
    %v774 = vld [vmem:[#allocation8 + $0xe0] sm:$0xff]
    %v775 = vld [vmem:[#allocation8 + $0xe8] sm:$0xff]
    %v776 = vld [vmem:[#allocation8 + $0xf0] sm:$0xff]
    %v777 = vld [vmem:[#allocation8 + $0xf8] sm:$0xff]
    %v778 = vld [vmem:[#allocation8 + $0x100] sm:$0xff]
    %v779 = vld [vmem:[#allocation8 + $0x108] sm:$0xff]
    %v780 = vld [vmem:[#allocation8 + $0x110] sm:$0xff]
    %v781 = vld [vmem:[#allocation8 + $0x118] sm:$0xff]
    %v782 = vld [vmem:[#allocation8 + $0x120] sm:$0xff]
    %v783 = vld [vmem:[#allocation8 + $0x128] sm:$0xff]
    %v784 = vld [vmem:[#allocation8 + $0x130] sm:$0xff]
    %v785 = vld [vmem:[#allocation8 + $0x138] sm:$0xff]
    %v786 = vld [vmem:[#allocation8 + $0x140] sm:$0xff]
    %v787 = vld [vmem:[#allocation8 + $0x148] sm:$0xff]
    %v788 = vld [vmem:[#allocation8 + $0x150] sm:$0xff]
    %v789 = vld [vmem:[#allocation8 + $0x158] sm:$0xff]
    %v790 = vld [vmem:[#allocation8 + $0x160] sm:$0xff]
    %v791 = vld [vmem:[#allocation8 + $0x168] sm:$0xff]
    %v792 = vld [vmem:[#allocation8 + $0x170] sm:$0xff]
    %v793 = vld [vmem:[#allocation8 + $0x178] sm:$0xff]
    %v794 = vld [vmem:[#allocation8 + $0x180] sm:$0xff]
    %v795 = vld [vmem:[#allocation8 + $0x188] sm:$0xff]
    %v796 = vld [vmem:[#allocation8 + $0x190] sm:$0xff]
    %v797 = vld [vmem:[#allocation8 + $0x198] sm:$0xff]
    %v798 = vld [vmem:[#allocation8 + $0x1a0] sm:$0xff]
    %v799 = vld [vmem:[#allocation8 + $0x1a8] sm:$0xff]
    %v800 = vld [vmem:[#allocation8 + $0x1b0] sm:$0xff]
    %v801 = vld [vmem:[#allocation8 + $0x1b8] sm:$0xff]
    %v802 = vld [vmem:[#allocation8 + $0x1c0] sm:$0xff]
    %v803 = vld [vmem:[#allocation8 + $0x1c8] sm:$0xff]
    %v804 = vld [vmem:[#allocation8 + $0x1d0] sm:$0xff]
    %v805 = vld [vmem:[#allocation8 + $0x1d8] sm:$0xff]
    %v806 = vld [vmem:[#allocation8 + $0x1e0] sm:$0xff]
    %v807 = vld [vmem:[#allocation8 + $0x1e8] sm:$0xff]
    %v808 = vld [vmem:[#allocation8 + $0x1f0] sm:$0xff]
    %v809 = vld [vmem:[#allocation8 + $0x1f8] sm:$0xff]
    %v810 = vld [vmem:[%s12] sm:$0xf]
    %v811 = vld [vmem:[%s13] sm:$0xf]
    %v820 = vunpack.c.l.b16 %v736
    %v821 = vunpack.c.h.b16 %v736
    %v822 = vunpack.c.l.b16 %v737
    %v823 = vunpack.c.h.b16 %v737
    %v824 = vunpack.c.l.b16 %v738
    %v825 = vunpack.c.h.b16 %v738
    %v826 = vunpack.c.l.b16 %v739
    %v827 = vunpack.c.h.b16 %v739
    %v828 = vunpack.c.l.b16 %v740
    %v829 = vunpack.c.h.b16 %v740
    %v830 = vunpack.c.l.b16 %v741
    %v831 = vunpack.c.h.b16 %v741
    %v832 = vunpack.c.l.b16 %v742
    %v833 = vunpack.c.h.b16 %v742
    %v834 = vunpack.c.l.b16 %v743
    %v835 = vunpack.c.h.b16 %v743
    %v836 = vpack.c.b16 %v822, %v820
    %v837 = vpack.c.b16 %v823, %v821
    %v838 = vpack.c.b16 %v826, %v824
    %v839 = vpack.c.b16 %v827, %v825
    %v840 = vpack.c.b16 %v830, %v828
    %v841 = vpack.c.b16 %v831, %v829
    %v842 = vpack.c.b16 %v834, %v832
    %v843 = vpack.c.b16 %v835, %v833
    %vm852 = vcmask 523264
    %v854 = vsel %vm852, %v735, 0
    %856 = vmatprep.subr.bf16.mxu0 0
    %857 = vmatpush1.bf16.msra.mxu0 0
    %858 = vmatprep.subr.bf16.mxu0 0
    %859 = vmatpush1.bf16.msra.mxu0 0
    %860 = vmatprep.subr.bf16.mxu0 0
    %861 = vmatpush1.bf16.msra.mxu0 0
    %862 = vmatprep.subr.bf16.mxu0 0
    %863 = vmatpush1.bf16.msra.mxu0 0
    %864 = vmatprep.subr.bf16.mxu0 %v843
    %865 = vmatpush1.bf16.msra.mxu0 %v842
    %866 = vmatprep.subr.bf16.mxu0 %v841
    %867 = vmatpush1.bf16.msra.mxu0 %v840
    %868 = vmatprep.subr.bf16.mxu0 %v839
    %869 = vmatpush1.bf16.msra.mxu0 %v838
    %870 = vmatprep.subr.bf16.mxu0 %v837
    %871 = vmatpush1.bf16.msra.mxu0 %v836
    %872 = vmatprep.subr.bf16.mxu0 0
    %873 = vmatpush2.bf16.msra.mxu0 0
    %874 = vmatprep.subr.bf16.mxu0 0
    %875 = vmatpush2.bf16.msra.mxu0 0
    %876 = vmatprep.subr.bf16.mxu0 0
    %877 = vmatpush2.bf16.msra.mxu0 0
    %878 = vmatprep.subr.bf16.mxu0 0
    %879 = vmatpush2.bf16.msra.mxu0 0
    %880 = vmatprep.subr.bf16.mxu0 0
    %881 = vmatpush2.bf16.msra.mxu0 0
    %882 = vmatprep.subr.bf16.mxu0 0
    %883 = vmatpush2.bf16.msra.mxu0 0
    %884 = vmatprep.subr.bf16.mxu0 0
    %885 = vmatpush2.bf16.msra.mxu0 0
    %886 = vmatprep.subr.bf16.mxu0 0
    %887 = vmatpush2.bf16.msra.mxu0 0
    %888 = vmatprep.mubr.bf16.mxu0 0
    %889 = vmatmul.mubr.bf16.gmra.mxu0 %v854
    %v890 = vpop.f32.mrf.mxu0
    %v891 = vadd.f32 0.0, %v890
    %v892 = vpop.f32.mrf.mxu0
    %v893 = vadd.f32 0.0, %v892
    %v894 = vpop.f32.mrf.mxu0
    %v895 = vpop.f32.mrf.mxu0
    %896 = vdwg.mxu0
    %v898 = vlaneseq
    %v899 = vshrl.u32 %v898, 7
    %v900 = vsub.s32 0, %v899
    %v901 = vrot.slane %v744, %v900
    %v902 = vlaneseq
    %v903 = vshrl.u32 %v902, 7
    %v904 = vsub.s32 1, %v903
    %v905 = vrot.slane %v744, %v904
    %v908 = vmul.f32 %v891, %v901
    %v909 = vmul.f32 %v893, %v905
    %v911 = vlaneseq
    %v912 = vshrl.u32 %v911, 7
    %v913 = vsub.s32 0, %v912
    %v914 = vrot.slane %v745, %v913
    %v915 = vlaneseq
    %v916 = vshrl.u32 %v915, 7
    %v917 = vsub.s32 1, %v916
    %v918 = vrot.slane %v745, %v917
    %v921 = vadd.f32 %v908, %v914
    %v922 = vadd.f32 %v909, %v918
    %v923 = vmax.f32 %v921, 0.0
    %v924 = vmax.f32 %v922, 0.0
    %v925 = vpack.c.bf16 %v923, %v923
    %v926 = vpack.c.bf16 %v924, %v924
    %v991 = vunpack.c.l.b16 %v746
    %v992 = vunpack.c.h.b16 %v746
    %v993 = vunpack.c.l.b16 %v747
    %v994 = vunpack.c.h.b16 %v747
    %v995 = vunpack.c.l.b16 %v748
    %v996 = vunpack.c.h.b16 %v748
    %v997 = vunpack.c.l.b16 %v749
    %v998 = vunpack.c.h.b16 %v749
    %v999 = vunpack.c.l.b16 %v750
    %v1000 = vunpack.c.h.b16 %v750
    %v1001 = vunpack.c.l.b16 %v751
    %v1002 = vunpack.c.h.b16 %v751
    %v1003 = vunpack.c.l.b16 %v752
    %v1004 = vunpack.c.h.b16 %v752
    %v1005 = vunpack.c.l.b16 %v753
    %v1006 = vunpack.c.h.b16 %v753
    %v1007 = vunpack.c.l.b16 %v754
    %v1008 = vunpack.c.h.b16 %v754
    %v1009 = vunpack.c.l.b16 %v755
    %v1010 = vunpack.c.h.b16 %v755
    %v1011 = vunpack.c.l.b16 %v756
    %v1012 = vunpack.c.h.b16 %v756
    %v1013 = vunpack.c.l.b16 %v757
    %v1014 = vunpack.c.h.b16 %v757
    %v1015 = vunpack.c.l.b16 %v758
    %v1016 = vunpack.c.h.b16 %v758
    %v1017 = vunpack.c.l.b16 %v759
    %v1018 = vunpack.c.h.b16 %v759
    %v1019 = vunpack.c.l.b16 %v760
    %v1020 = vunpack.c.h.b16 %v760
    %v1021 = vunpack.c.l.b16 %v761
    %v1022 = vunpack.c.h.b16 %v761
    %v1023 = vunpack.c.l.b16 %v762
    %v1024 = vunpack.c.h.b16 %v762
    %v1025 = vunpack.c.l.b16 %v763
    %v1026 = vunpack.c.h.b16 %v763
    %v1027 = vunpack.c.l.b16 %v764
    %v1028 = vunpack.c.h.b16 %v764
    %v1029 = vunpack.c.l.b16 %v765
    %v1030 = vunpack.c.h.b16 %v765
    %v1031 = vunpack.c.l.b16 %v766
    %v1032 = vunpack.c.h.b16 %v766
    %v1033 = vunpack.c.l.b16 %v767
    %v1034 = vunpack.c.h.b16 %v767
    %v1035 = vunpack.c.l.b16 %v768
    %v1036 = vunpack.c.h.b16 %v768
    %v1037 = vunpack.c.l.b16 %v769
    %v1038 = vunpack.c.h.b16 %v769
    %v1039 = vunpack.c.l.b16 %v770
    %v1040 = vunpack.c.h.b16 %v770
    %v1041 = vunpack.c.l.b16 %v771
    %v1042 = vunpack.c.h.b16 %v771
    %v1043 = vunpack.c.l.b16 %v772
    %v1044 = vunpack.c.h.b16 %v772
    %v1045 = vunpack.c.l.b16 %v773
    %v1046 = vunpack.c.h.b16 %v773
    %v1047 = vunpack.c.l.b16 %v774
    %v1048 = vunpack.c.h.b16 %v774
    %v1049 = vunpack.c.l.b16 %v775
    %v1050 = vunpack.c.h.b16 %v775
    %v1051 = vunpack.c.l.b16 %v776
    %v1052 = vunpack.c.h.b16 %v776
    %v1053 = vunpack.c.l.b16 %v777
    %v1054 = vunpack.c.h.b16 %v777
    %v1055 = vunpack.c.l.b16 %v778
    %v1056 = vunpack.c.h.b16 %v778
    %v1057 = vunpack.c.l.b16 %v779
    %v1058 = vunpack.c.h.b16 %v779
    %v1059 = vunpack.c.l.b16 %v780
    %v1060 = vunpack.c.h.b16 %v780
    %v1061 = vunpack.c.l.b16 %v781
    %v1062 = vunpack.c.h.b16 %v781
    %v1063 = vunpack.c.l.b16 %v782
    %v1064 = vunpack.c.h.b16 %v782
    %v1065 = vunpack.c.l.b16 %v783
    %v1066 = vunpack.c.h.b16 %v783
    %v1067 = vunpack.c.l.b16 %v784
    %v1068 = vunpack.c.h.b16 %v784
    %v1069 = vunpack.c.l.b16 %v785
    %v1070 = vunpack.c.h.b16 %v785
    %v1071 = vunpack.c.l.b16 %v786
    %v1072 = vunpack.c.h.b16 %v786
    %v1073 = vunpack.c.l.b16 %v787
    %v1074 = vunpack.c.h.b16 %v787
    %v1075 = vunpack.c.l.b16 %v788
    %v1076 = vunpack.c.h.b16 %v788
    %v1077 = vunpack.c.l.b16 %v789
    %v1078 = vunpack.c.h.b16 %v789
    %v1079 = vunpack.c.l.b16 %v790
    %v1080 = vunpack.c.h.b16 %v790
    %v1081 = vunpack.c.l.b16 %v791
    %v1082 = vunpack.c.h.b16 %v791
    %v1083 = vunpack.c.l.b16 %v792
    %v1084 = vunpack.c.h.b16 %v792
    %v1085 = vunpack.c.l.b16 %v793
    %v1086 = vunpack.c.h.b16 %v793
    %v1087 = vunpack.c.l.b16 %v794
    %v1088 = vunpack.c.h.b16 %v794
    %v1089 = vunpack.c.l.b16 %v795
    %v1090 = vunpack.c.h.b16 %v795
    %v1091 = vunpack.c.l.b16 %v796
    %v1092 = vunpack.c.h.b16 %v796
    %v1093 = vunpack.c.l.b16 %v797
    %v1094 = vunpack.c.h.b16 %v797
    %v1095 = vunpack.c.l.b16 %v798
    %v1096 = vunpack.c.h.b16 %v798
    %v1097 = vunpack.c.l.b16 %v799
    %v1098 = vunpack.c.h.b16 %v799
    %v1099 = vunpack.c.l.b16 %v800
    %v1100 = vunpack.c.h.b16 %v800
    %v1101 = vunpack.c.l.b16 %v801
    %v1102 = vunpack.c.h.b16 %v801
    %v1103 = vunpack.c.l.b16 %v802
    %v1104 = vunpack.c.h.b16 %v802
    %v1105 = vunpack.c.l.b16 %v803
    %v1106 = vunpack.c.h.b16 %v803
    %v1107 = vunpack.c.l.b16 %v804
    %v1108 = vunpack.c.h.b16 %v804
    %v1109 = vunpack.c.l.b16 %v805
    %v1110 = vunpack.c.h.b16 %v805
    %v1111 = vunpack.c.l.b16 %v806
    %v1112 = vunpack.c.h.b16 %v806
    %v1113 = vunpack.c.l.b16 %v807
    %v1114 = vunpack.c.h.b16 %v807
    %v1115 = vunpack.c.l.b16 %v808
    %v1116 = vunpack.c.h.b16 %v808
    %v1117 = vunpack.c.l.b16 %v809
    %v1118 = vunpack.c.h.b16 %v809
    %v1119 = vpack.c.b16 %v995, %v991
    %v1120 = vpack.c.b16 %v996, %v992
    %v1121 = vpack.c.b16 %v997, %v993
    %v1122 = vpack.c.b16 %v998, %v994
    %v1123 = vpack.c.b16 %v1003, %v999
    %v1124 = vpack.c.b16 %v1004, %v1000
    %v1125 = vpack.c.b16 %v1005, %v1001
    %v1126 = vpack.c.b16 %v1006, %v1002
    %v1127 = vpack.c.b16 %v1011, %v1007
    %v1128 = vpack.c.b16 %v1012, %v1008
    %v1129 = vpack.c.b16 %v1013, %v1009
    %v1130 = vpack.c.b16 %v1014, %v1010
    %v1131 = vpack.c.b16 %v1019, %v1015
    %v1132 = vpack.c.b16 %v1020, %v1016
    %v1133 = vpack.c.b16 %v1021, %v1017
    %v1134 = vpack.c.b16 %v1022, %v1018
    %v1135 = vpack.c.b16 %v1027, %v1023
    %v1136 = vpack.c.b16 %v1028, %v1024
    %v1137 = vpack.c.b16 %v1029, %v1025
    %v1138 = vpack.c.b16 %v1030, %v1026
    %v1139 = vpack.c.b16 %v1035, %v1031
    %v1140 = vpack.c.b16 %v1036, %v1032
    %v1141 = vpack.c.b16 %v1037, %v1033
    %v1142 = vpack.c.b16 %v1038, %v1034
    %v1143 = vpack.c.b16 %v1043, %v1039
    %v1144 = vpack.c.b16 %v1044, %v1040
    %v1145 = vpack.c.b16 %v1045, %v1041
    %v1146 = vpack.c.b16 %v1046, %v1042
    %v1147 = vpack.c.b16 %v1051, %v1047
    %v1148 = vpack.c.b16 %v1052, %v1048
    %v1149 = vpack.c.b16 %v1053, %v1049
    %v1150 = vpack.c.b16 %v1054, %v1050
    %v1151 = vpack.c.b16 %v1059, %v1055
    %v1152 = vpack.c.b16 %v1060, %v1056
    %v1153 = vpack.c.b16 %v1061, %v1057
    %v1154 = vpack.c.b16 %v1062, %v1058
    %v1155 = vpack.c.b16 %v1067, %v1063
    %v1156 = vpack.c.b16 %v1068, %v1064
    %v1157 = vpack.c.b16 %v1069, %v1065
    %v1158 = vpack.c.b16 %v1070, %v1066
    %v1159 = vpack.c.b16 %v1075, %v1071
    %v1160 = vpack.c.b16 %v1076, %v1072
    %v1161 = vpack.c.b16 %v1077, %v1073
    %v1162 = vpack.c.b16 %v1078, %v1074
    %v1163 = vpack.c.b16 %v1083, %v1079
    %v1164 = vpack.c.b16 %v1084, %v1080
    %v1165 = vpack.c.b16 %v1085, %v1081
    %v1166 = vpack.c.b16 %v1086, %v1082
    %v1167 = vpack.c.b16 %v1091, %v1087
    %v1168 = vpack.c.b16 %v1092, %v1088
    %v1169 = vpack.c.b16 %v1093, %v1089
    %v1170 = vpack.c.b16 %v1094, %v1090
    %v1171 = vpack.c.b16 %v1099, %v1095
    %v1172 = vpack.c.b16 %v1100, %v1096
    %v1173 = vpack.c.b16 %v1101, %v1097
    %v1174 = vpack.c.b16 %v1102, %v1098
    %v1175 = vpack.c.b16 %v1107, %v1103
    %v1176 = vpack.c.b16 %v1108, %v1104
    %v1177 = vpack.c.b16 %v1109, %v1105
    %v1178 = vpack.c.b16 %v1110, %v1106
    %v1179 = vpack.c.b16 %v1115, %v1111
    %v1180 = vpack.c.b16 %v1116, %v1112
    %v1181 = vpack.c.b16 %v1117, %v1113
    %v1182 = vpack.c.b16 %v1118, %v1114
    %1247 = vmatprep.subr.bf16.mxu0 %v1148
    %1248 = vmatpush1.bf16.msra.mxu0 %v1147
    %1249 = vmatprep.subr.bf16.mxu0 %v1144
    %1250 = vmatpush1.bf16.msra.mxu0 %v1143
    %1251 = vmatprep.subr.bf16.mxu0 %v1140
    %1252 = vmatpush1.bf16.msra.mxu0 %v1139
    %1253 = vmatprep.subr.bf16.mxu0 %v1136
    %1254 = vmatpush1.bf16.msra.mxu0 %v1135
    %1255 = vmatprep.subr.bf16.mxu0 %v1132
    %1256 = vmatpush1.bf16.msra.mxu0 %v1131
    %1257 = vmatprep.subr.bf16.mxu0 %v1128
    %1258 = vmatpush1.bf16.msra.mxu0 %v1127
    %1259 = vmatprep.subr.bf16.mxu0 %v1124
    %1260 = vmatpush1.bf16.msra.mxu0 %v1123
    %1261 = vmatprep.subr.bf16.mxu0 %v1120
    %1262 = vmatpush1.bf16.msra.mxu0 %v1119
    %1263 = vmatprep.subr.bf16.mxu0 %v1180
    %1264 = vmatpush2.bf16.msra.mxu0 %v1179
    %1265 = vmatprep.subr.bf16.mxu0 %v1176
    %1266 = vmatpush2.bf16.msra.mxu0 %v1175
    %1267 = vmatprep.subr.bf16.mxu0 %v1172
    %1268 = vmatpush2.bf16.msra.mxu0 %v1171
    %1269 = vmatprep.subr.bf16.mxu0 %v1168
    %1270 = vmatpush2.bf16.msra.mxu0 %v1167
    %1271 = vmatprep.subr.bf16.mxu0 %v1164
    %1272 = vmatpush2.bf16.msra.mxu0 %v1163
    %1273 = vmatprep.subr.bf16.mxu0 %v1160
    %1274 = vmatpush2.bf16.msra.mxu0 %v1159
    %1275 = vmatprep.subr.bf16.mxu0 %v1156
    %1276 = vmatpush2.bf16.msra.mxu0 %v1155
    %1277 = vmatprep.subr.bf16.mxu0 %v1152
    %1278 = vmatpush2.bf16.msra.mxu0 %v1151
    %1279 = vmatprep.mubr.bf16.mxu0 %v926
    %1280 = vmatmul.mubr.bf16.gmra.mxu0 %v925
    %v1281 = vpop.f32.mrf.mxu0
    %v1282 = vadd.f32 0.0, %v1281
    %v1283 = vpop.f32.mrf.mxu0
    %v1284 = vadd.f32 0.0, %v1283
    %v1285 = vpop.f32.mrf.mxu0
    %v1286 = vpop.f32.mrf.mxu0
    %1287 = vdwg.mxu0
    %1288 = vmatprep.subr.bf16.mxu0 %v1150
    %1289 = vmatpush1.bf16.msra.mxu0 %v1149
    %1290 = vmatprep.subr.bf16.mxu0 %v1146
    %1291 = vmatpush1.bf16.msra.mxu0 %v1145
    %1292 = vmatprep.subr.bf16.mxu0 %v1142
    %1293 = vmatpush1.bf16.msra.mxu0 %v1141
    %1294 = vmatprep.subr.bf16.mxu0 %v1138
    %1295 = vmatpush1.bf16.msra.mxu0 %v1137
    %1296 = vmatprep.subr.bf16.mxu0 %v1134
    %1297 = vmatpush1.bf16.msra.mxu0 %v1133
    %1298 = vmatprep.subr.bf16.mxu0 %v1130
    %1299 = vmatpush1.bf16.msra.mxu0 %v1129
    %1300 = vmatprep.subr.bf16.mxu0 %v1126
    %1301 = vmatpush1.bf16.msra.mxu0 %v1125
    %1302 = vmatprep.subr.bf16.mxu0 %v1122
    %1303 = vmatpush1.bf16.msra.mxu0 %v1121
    %1304 = vmatprep.subr.bf16.mxu0 %v1182
    %1305 = vmatpush2.bf16.msra.mxu0 %v1181
    %1306 = vmatprep.subr.bf16.mxu0 %v1178
    %1307 = vmatpush2.bf16.msra.mxu0 %v1177
    %1308 = vmatprep.subr.bf16.mxu0 %v1174
    %1309 = vmatpush2.bf16.msra.mxu0 %v1173
    %1310 = vmatprep.subr.bf16.mxu0 %v1170
    %1311 = vmatpush2.bf16.msra.mxu0 %v1169
    %1312 = vmatprep.subr.bf16.mxu0 %v1166
    %1313 = vmatpush2.bf16.msra.mxu0 %v1165
    %1314 = vmatprep.subr.bf16.mxu0 %v1162
    %1315 = vmatpush2.bf16.msra.mxu0 %v1161
    %1316 = vmatprep.subr.bf16.mxu0 %v1158
    %1317 = vmatpush2.bf16.msra.mxu0 %v1157
    %1318 = vmatprep.subr.bf16.mxu0 %v1154
    %1319 = vmatpush2.bf16.msra.mxu0 %v1153
    %1320 = vmatprep.mubr.bf16.mxu0 %v926
    %1321 = vmatmul.mubr.bf16.gmra.mxu0 %v925
    %v1322 = vpop.f32.mrf.mxu0
    %v1323 = vadd.f32 0.0, %v1322
    %v1324 = vpop.f32.mrf.mxu0
    %v1325 = vadd.f32 0.0, %v1324
    %v1326 = vpop.f32.mrf.mxu0
    %v1327 = vpop.f32.mrf.mxu0
    %1328 = vdwg.mxu0
    %v1330 = vlaneseq
    %v1331 = vshrl.u32 %v1330, 7
    %v1332 = vsub.s32 0, %v1331
    %v1333 = vrot.slane %v810, %v1332
    %v1334 = vlaneseq
    %v1335 = vshrl.u32 %v1334, 7
    %v1336 = vsub.s32 1, %v1335
    %v1337 = vrot.slane %v810, %v1336
    %v1338 = vlaneseq
    %v1339 = vshrl.u32 %v1338, 7
    %v1340 = vsub.s32 2, %v1339
    %v1341 = vrot.slane %v810, %v1340
    %v1342 = vlaneseq
    %v1343 = vshrl.u32 %v1342, 7
    %v1344 = vsub.s32 3, %v1343
    %v1345 = vrot.slane %v810, %v1344
    %v1350 = vmul.f32 %v1282, %v1333
    %v1351 = vmul.f32 %v1284, %v1337
    %v1352 = vmul.f32 %v1323, %v1341
    %v1353 = vmul.f32 %v1325, %v1345
    %v1355 = vlaneseq
    %v1356 = vshrl.u32 %v1355, 7
    %v1357 = vsub.s32 0, %v1356
    %v1358 = vrot.slane %v811, %v1357
    %v1359 = vlaneseq
    %v1360 = vshrl.u32 %v1359, 7
    %v1361 = vsub.s32 1, %v1360
    %v1362 = vrot.slane %v811, %v1361
    %v1363 = vlaneseq
    %v1364 = vshrl.u32 %v1363, 7
    %v1365 = vsub.s32 2, %v1364
    %v1366 = vrot.slane %v811, %v1365
    %v1367 = vlaneseq
    %v1368 = vshrl.u32 %v1367, 7
    %v1369 = vsub.s32 3, %v1368
    %v1370 = vrot.slane %v811, %v1369
    %v1375 = vadd.f32 %v1350, %v1358
    %v1376 = vadd.f32 %v1351, %v1362
    %v1377 = vadd.f32 %v1352, %v1366
    %v1378 = vadd.f32 %v1353, %v1370
    %v1379 = vmax.f32 %v1375, 0.0
    %v1380 = vmax.f32 %v1376, 0.0
    %v1381 = vmax.f32 %v1377, 0.0
    %v1382 = vmax.f32 %v1378, 0.0
    %1383 = vst [vmem:[#allocation11] sm:$0xff] %v1379
    %1384 = vst [vmem:[#allocation11 + $0x8] sm:$0xff] %v1380
    %1385 = vst [vmem:[#allocation11 + $0x10] sm:$0xff] %v1381
    %1386 = vst [vmem:[#allocation11 + $0x18] sm:$0xff] %v1382
    // Predicated region
    $region74: #{_unimodal_call.1} parent=1 // pred_check
      _
    $region75: #{_unimodal_call.1} parent=1 // pred_check_branch
      %1388 = sbr.rel (0) target = $region77
    $region76: #{_unimodal_call.1} parent=1 // pred_region
      %s1390 = ssub.s32 512, 512
      %1391 = vsyncadd [#allocation4], %s1390
      %s1393 = sshll.u32 [#allocation10], 4
      %s1394 = int_to_ptr.vmem [resolvable:$true] %s1393
      %1396 = dma.vmem_to_hbm [thread:$0]  %s1394, 512, %s14, [#allocation4]
    $region77: #{_unimodal_call.1} parent=1 // pred_fallthru
      _
    // Predicated region
    $region78: #{_unimodal_call.1} parent=1 // pred_check
      _
    $region79: #{_unimodal_call.1} parent=1 // pred_check_branch
      %1398 = sbr.rel (0) target = $region81
    $region80: #{_unimodal_call.1} parent=1 // pred_region
      %s1400 = ssub.s32 512, 512
      %1401 = vsyncadd [#allocation12], %s1400
      %s1403 = sshll.u32 [#allocation11], 4
      %s1404 = int_to_ptr.vmem [resolvable:$true] %s1403
      %1406 = dma.vmem_to_hbm [thread:$0]  %s1404, 512, %s15, [#allocation12]
    $region81: #{_unimodal_call.1} parent=1 // pred_fallthru
      _
    // Predicated region
    $region82: #{_unimodal_call.1} parent=1 // pred_check
      _
    $region83: #{_unimodal_call.1} parent=1 // pred_check_branch
      %1408 = sbr.rel (0) target = $region85
    $region84: #{_unimodal_call.1} parent=1 // pred_region
      %1409 = dma.done [#allocation4], 512
    $region85: #{_unimodal_call.1} parent=1 // pred_fallthru
      _
    // Predicated region
    $region86: #{_unimodal_call.1} parent=1 // pred_check
      _
    $region87: #{_unimodal_call.1} parent=1 // pred_check_branch
      %1411 = sbr.rel (0) target = $region89
    $region88: #{_unimodal_call.1} parent=1 // pred_region
      %1412 = dma.done [#allocation12], 512
    $region89: #{_unimodal_call.1} parent=1 // pred_fallthru
      _
    %1413 = vsyncpa [#allocation3], 1
    %1414 = vsyncpa [#allocation6], 1
    %1415 = vsyncpa [#allocation9], 1
    %1416 = vsyncpa [#allocation4], 1
    %1417 = vsyncpa [#allocation12], 1

</llo_original>
